<compile_context>
chip_gen: v6e
topology: v6e:2x2x1
jax: 0.10.0
libtpu: 0.0.40
codegen_flags: <defaults>
</compile_context>

<pallas_src>
import math

import jax
import jax.numpy as jnp
from jax.experimental import pallas as pl
from jax.experimental.pallas import tpu as pltpu


def _hbm_copy_kernel(x_ref, o_ref, sem):
    # Single full-buffer HBM -> HBM DMA.  No grid, no VMEM staging, no
    # per-step overhead; the DMA engine streams at HBM bandwidth
    # (~0.82 / 1.4 / 3.2 TB/s on v5e / v6e / v7x).
    cp = pltpu.make_async_copy(x_ref, o_ref, sem)
    cp.start()
    cp.wait()


def _pallas_hbm_copy(x: jax.Array) -> jax.Array:
    """Materialize a fresh HBM buffer holding a copy of `x` (same shape)."""
    return pl.pallas_call(
        _hbm_copy_kernel,
        out_shape=jax.ShapeDtypeStruct(x.shape, x.dtype),
        in_specs=[pl.BlockSpec(memory_space=pl.ANY)],
        out_specs=pl.BlockSpec(memory_space=pl.ANY),
        scratch_shapes=[pltpu.SemaphoreType.DMA],
    )(x)


def _resolve_out_shape(in_shape: tuple, out_shape: tuple) -> tuple:
    """Resolve a possible -1 in out_shape with torch.reshape semantics."""
    total = math.prod(in_shape)
    out_shape = list(out_shape)
    if -1 in out_shape:
        assert out_shape.count(-1) == 1, "only one -1 allowed in out_shape"
        known = math.prod(d for d in out_shape if d != -1)
        assert known > 0, "cannot infer -1 next to a zero-sized dimension"
        assert total % known == 0, "reshape size mismatch"
        out_shape[out_shape.index(-1)] = total // known
    out_shape = tuple(out_shape)
    assert math.prod(out_shape) == total, "reshape size mismatch"
    return out_shape


def reshape_module(x: jax.Array, out_shape: tuple, *,
                   force_copy: bool = False) -> jax.Array:
    """JAX/Pallas equivalent of ReshapeModule(out_shape)(x).

    Default path: zero-cost metadata reshape (optimal on every TPU
    generation — no HBM read/write, no kernel launch).  If `force_copy`
    is set, the result is additionally materialized into a fresh buffer
    via a single HBM->HBM DMA Pallas kernel.
    """
    shape = _resolve_out_shape(x.shape, out_shape)

    # Primary path: reshape is metadata-only; let XLA do it for free.
    y = x.reshape(shape)
    if not force_copy:
        return y

    # Zero-element tensors: nothing to copy; keep the metadata result.
    if math.prod(shape) == 0:
        return y

    return _pallas_hbm_copy(y)


if __name__ == "__main__":
    key = jax.random.PRNGKey(0)
    # NCHW input, small shapes: batch=2, channels=4, spatial=16.
    x = jax.random.normal(key, (2, 4, 16, 16), dtype=jnp.float32)
    out_shape = (2, 4, 256)  # flatten spatial dims, same total element count
    ref = x.reshape(out_shape)

    # Default (recommended) path: pure metadata reshape.
    y_meta = jax.block_until_ready(reshape_module(x, out_shape))
    assert y_meta.shape == out_shape
    assert y_meta.dtype == x.dtype
    assert jnp.array_equal(y_meta, ref)

    # Kernel path: exercise the HBM->HBM DMA copy once.
    y_copy = jax.block_until_ready(reshape_module(x, out_shape, force_copy=True))
    assert y_copy.shape == out_shape
    assert y_copy.dtype == x.dtype
    assert jnp.array_equal(y_copy, ref)

    # Also exercise the -1 resolution path (torch semantics) through the kernel.
    y2 = jax.block_until_ready(reshape_module(x, (2, -1), force_copy=True))
    assert y2.shape == (2, 1024)
    assert jnp.array_equal(y2, x.reshape(2, 1024))

    print("KERNEL_OK")
</pallas_src>

<mosaic_0001>
module attributes {stable_mosaic.version = 11 : i64} {
  func.func @_hbm_copy_kernel(%arg0: memref<2x4x256xf32, #tpu.memory_space<any>>, %arg1: memref<2x4x256xf32, #tpu.memory_space<any>>, %arg2: memref<!tpu.dma_semaphore, #tpu.memory_space<semaphore_mem>>) attributes {dimension_semantics = [], scalar_prefetch = 0 : i64, scratch_operands = 1 : i64, tpu.core_type = #tpu.core_type<tc>} {
    tpu.enqueue_dma source(%arg0 : memref<2x4x256xf32, #tpu.memory_space<any>>) target(%arg1 : memref<2x4x256xf32, #tpu.memory_space<any>>) target_semaphore(%arg2 : memref<!tpu.dma_semaphore, #tpu.memory_space<semaphore_mem>>)
    tpu.wait_dma2 semaphore(%arg2 : memref<!tpu.dma_semaphore, #tpu.memory_space<semaphore_mem>>) src(%arg0 : memref<2x4x256xf32, #tpu.memory_space<any>>) dst(%arg1 : memref<2x4x256xf32, #tpu.memory_space<any>>)
    return
  }
}

</mosaic_0001>

<llo_original>
// kernel: tpu_custom_call.1
$region0: #{tpu_custom_call.1}
  #allocation0 [shape = 'u32[]', space=smem, size = 0x4, offset = 0x4, fixed_abs, tag = 'smem constant byte address 0x4 - core index']
  #allocation1 [shape = 'u32[144,128]{1,0:T(1,128)}', space=vmem, size = 0x12000, scoped, tag = 'internal scratch']
  #allocation2 [shape = 's32[1]{0}', space=sflag, size = 0x4, scoped, tag = 'scratch operand']
  #allocation3 [shape = 's32[]', space=sflag, size = 0x4, offset = 0, fixed_abs, tag = 'sflag constant byte address 0x0 - dummy sync flag']
  #allocation4 [shape = 'u32[0]{0}', space=smem, size = 0, offset = 0, fixed_abs, tag = 'smem constant byte address 0x0 - null']
  %s0 = inlined_call_operand.hbm [shape: f32[2,4,256], index: 0, kind: input, shape index: {}]
  %s1 = inlined_call_operand.hbm [shape: f32[2,4,256], index: 1, kind: output, shape index: {}]
  %s2 = sld [smem:[#allocation0]]
  $region2: #{tpu_custom_call.1} parent=0
    _
  %s4 = ssub.s32 1, %s2
  %s5 = scalar_select 0, %s4, %s2
  %s7 = sshll.u32 1, 14
  %s8 = sxor.u32 4294967295, %s7
  %12 = dma.general %s0, 256, %s1, [#allocation2], 131072, [#allocation4], 0, 0
  %s13 = smul.u32 4, 2
  %s14 = smul.u32 %s13, 1
  %s15 = smul.u32 %s14, 2
  %s16 = sshll.u32 %s15, 4
  %17 = dma.done [#allocation2], %s16
  %18 = vsyncmov [#allocation2]
  %s19 = vpop.sfrf %18
  %p20 = scmp.eq.s32.totalorder %s19, 0
  %p21 = pneg %p20
  %23 = shalt.err (%p21)

</llo_original>
